<compile_context>
chip_gen: v5e
topology: v5e:2x2
jax: 0.10.0
libtpu: 0.0.40
codegen_flags: <defaults>
</compile_context>

<pallas_src>
import functools

import jax
import jax.numpy as jnp
from jax.experimental import pallas as pl
from jax.experimental.pallas import tpu as pltpu

PAD = 128                    # lane width: every feature dim zero-padded to this
BIAS_REP = 8                 # each bias replicated across 8 sublanes in the slab
W1_OFF, W2_OFF, W3_OFF = 0, PAD, 2 * PAD


def _mlp_kernel(x_ref, w_ref, b_ref, o_ref, xs_ref):
    """Fused 3-layer MLP: (B, in) x packed params -> (B, out)."""
    batch, in_size = x_ref.shape
    out_size = o_ref.shape[1]

    # Zero-extend x to the full 128-lane width inside the kernel (no wrapper
    # pad op).  Padded lanes hit zero weight rows, so results are unchanged.
    xs_ref[...] = jnp.zeros_like(xs_ref)
    xs_ref[:, :in_size] = x_ref[...]

    w1 = w_ref[W1_OFF:W1_OFF + PAD, :]           # (128, 128) bf16, aligned views
    w2 = w_ref[W2_OFF:W2_OFF + PAD, :]
    w3 = w_ref[W3_OFF:W3_OFF + PAD, :]

    def bias(idx):
        base = idx * BIAS_REP
        if batch <= BIAS_REP:
            # Pre-broadcast rows: aligned (batch,128) load -> plain VPU add.
            return b_ref[base:base + batch, :]
        # Larger batch: fall back to implicit (1,128) -> (batch,128) broadcast.
        return b_ref[base:base + 1, :]

    # Layer 1: Linear + ReLU  (bf16 MXU pass, f32 accumulate, f32 epilogue)
    h = jnp.dot(xs_ref[...].astype(jnp.bfloat16), w1,
                preferred_element_type=jnp.float32)
    h = jnp.maximum(h + bias(0), 0.0)

    # Layer 2: Linear + ReLU
    h = jnp.dot(h.astype(jnp.bfloat16), w2, preferred_element_type=jnp.float32)
    h = jnp.maximum(h + bias(1), 0.0)

    # Layer 3: Linear (no activation); store only the real out_size columns.
    y = jnp.dot(h.astype(jnp.bfloat16), w3, preferred_element_type=jnp.float32)
    y = y + bias(2)
    o_ref[...] = y[:, :out_size]


def pack_params(params):
    """Pack parameters once into (w_blob bf16 (384,128), b_slab f32 (24,128)).

    Do this ONCE (e.g. after each training step) and keep both arrays resident
    on device; each forward call then moves only x plus these two buffers.
    """
    def pad_w(w):
        r, c = w.shape
        assert r <= PAD and c <= PAD, "layer width must be <= 128"
        return jnp.pad(w.astype(jnp.float32),
                       ((0, PAD - r), (0, PAD - c))).astype(jnp.bfloat16)

    def bias_rows(b):
        b = jnp.asarray(b, jnp.float32).reshape(1, -1)
        assert b.shape[1] <= PAD, "layer width must be <= 128"
        b = jnp.pad(b, ((0, 0), (0, PAD - b.shape[1])))
        return jnp.broadcast_to(b, (BIAS_REP, PAD))          # 8 identical rows

    w_blob = jnp.concatenate(
        [pad_w(params["w1"]), pad_w(params["w2"]), pad_w(params["w3"])],
        axis=0)                                              # (384, 128) bf16
    b_slab = jnp.concatenate(
        [bias_rows(params["b1"]), bias_rows(params["b2"]), bias_rows(params["b3"])],
        axis=0)                                              # (24, 128) f32
    return w_blob, b_slab


@functools.partial(jax.jit, static_argnames=("out_size",))
def linear_q_model_forward(x, w_blob, b_slab, *, out_size):
    """Run the fused MLP Pallas kernel.

    x:      (batch, in_size) float32, in_size <= 128 (passed unpadded)
    w_blob: (384, 128) bfloat16 from pack_params()
    b_slab: (24, 128) float32 from pack_params()
    """
    batch, in_size = x.shape
    assert in_size <= PAD and out_size <= PAD
    assert w_blob.shape == (3 * PAD, PAD) and w_blob.dtype == jnp.bfloat16
    assert b_slab.shape == (3 * BIAS_REP, PAD) and b_slab.dtype == jnp.float32

    cost = pl.CostEstimate(
        flops=2 * batch * PAD * PAD * 3,
        transcendentals=0,
        bytes_accessed=(x.size * 4 + w_blob.size * 2 + b_slab.size * 4
                        + batch * out_size * 4),
    )

    vmem = pl.BlockSpec(memory_space=pltpu.MemorySpace.VMEM)
    return pl.pallas_call(
        _mlp_kernel,
        out_shape=jax.ShapeDtypeStruct((batch, out_size), jnp.float32),
        in_specs=[vmem, vmem, vmem],
        out_specs=vmem,
        scratch_shapes=[pltpu.VMEM((batch, PAD), jnp.float32)],
        cost_estimate=cost,
    )(x.astype(jnp.float32), w_blob, b_slab)


def init_params(key, in_size, h1_size, h2_size, out_size):
    """Deterministic parameter init (PyTorch-style uniform bounds).

    Weights are stored pre-transposed as (fan_in, fan_out) so the kernel
    computes y = x @ W + b, matching nn.Linear(x) = x @ weight.T + bias.
    """
    ks = jax.random.split(key, 6)

    def layer(kw, kb, fan_in, fan_out):
        bound = 1.0 / jnp.sqrt(fan_in)
        w = jax.random.uniform(kw, (fan_in, fan_out), jnp.float32, -bound, bound)
        b = jax.random.uniform(kb, (1, fan_out), jnp.float32, -bound, bound)
        return w, b

    w1, b1 = layer(ks[0], ks[1], in_size, h1_size)
    w2, b2 = layer(ks[2], ks[3], h1_size, h2_size)
    w3, b3 = layer(ks[4], ks[5], h2_size, out_size)
    return {"w1": w1, "b1": b1, "w2": w2, "b2": b2, "w3": w3, "b3": b3}


def reference_forward_f32(x, p):
    h = jnp.maximum(x @ p["w1"] + p["b1"], 0.0)
    h = jnp.maximum(h @ p["w2"] + p["b2"], 0.0)
    return h @ p["w3"] + p["b3"]


def reference_forward_bf16(x, p):
    """Mirrors the kernel math: bf16 matmul inputs, f32 accumulation/epilogue."""
    def mm(a, w):
        return jnp.dot(a.astype(jnp.bfloat16), w.astype(jnp.bfloat16),
                       preferred_element_type=jnp.float32)
    h = jnp.maximum(mm(x, p["w1"]) + p["b1"], 0.0)
    h = jnp.maximum(mm(h, p["w2"]) + p["b2"], 0.0)
    return mm(h, p["w3"]) + p["b3"]


if __name__ == "__main__":
    # Snake Q-network: 11-dim state, two hidden layers, 3 actions.
    in_size, h1_size, h2_size, out_size = 11, 32, 32, 3
    batch = 8   # batching more states per call amortizes the fixed launch cost

    key = jax.random.PRNGKey(0)
    k_x, k_p = jax.random.split(key)

    x = jax.random.normal(k_x, (batch, in_size), dtype=jnp.float32)
    params = init_params(k_p, in_size, h1_size, h2_size, out_size)

    # Pack once; blobs stay resident on device across forward calls.
    w_blob, b_slab = jax.block_until_ready(pack_params(params))

    out = linear_q_model_forward(x, w_blob, b_slab, out_size=out_size)
    out = jax.block_until_ready(out)

    ref_bf16 = reference_forward_bf16(x, params)   # same math as the kernel
    ref_f32 = reference_forward_f32(x, params)     # full-precision sanity check

    assert out.shape == (batch, out_size)
    assert jnp.allclose(out, ref_bf16, atol=2e-3, rtol=2e-3), "mismatch vs bf16 ref"
    assert jnp.allclose(out, ref_f32, atol=5e-2, rtol=5e-2), "mismatch vs f32 ref"

    print("KERNEL_OK")
</pallas_src>

<mosaic_0001>
module attributes {stable_mosaic.version = 11 : i64} {
  func.func @_mlp_kernel(%arg0: memref<8x11xf32, #tpu.memory_space<vmem>>, %arg1: memref<384x128xbf16, #tpu.memory_space<vmem>>, %arg2: memref<24x128xf32, #tpu.memory_space<vmem>>, %arg3: memref<8x3xf32, #tpu.memory_space<vmem>>, %arg4: memref<8x128xf32, #tpu.memory_space<vmem>>) attributes {dimension_semantics = [], scalar_prefetch = 0 : i64, scratch_operands = 1 : i64, tpu.core_type = #tpu.core_type<tc>} {
    %cst = arith.constant 0.000000e+00 : f32
    %0 = vector.broadcast %cst : f32 to vector<8x128xf32>
    %c0 = arith.constant 0 : index
    %c0_0 = arith.constant 0 : index
    %1 = vector.load %arg4[%c0, %c0_0] : memref<8x128xf32, #tpu.memory_space<vmem>>, vector<8x128xf32>
    tpu.vector_store %arg4[%c0, %c0_0], %0 {strides = array<i32>} : memref<8x128xf32, #tpu.memory_space<vmem>>, vector<8x128xf32>,
    %c0_1 = arith.constant 0 : index
    %c0_2 = arith.constant 0 : index
    %2 = vector.load %arg0[%c0_1, %c0_2] : memref<8x11xf32, #tpu.memory_space<vmem>>, vector<8x11xf32>
    %c0_3 = arith.constant 0 : index
    %c0_4 = arith.constant 0 : index
    %3 = vector.load %arg4[%c0_3, %c0_4] : memref<8x128xf32, #tpu.memory_space<vmem>>, vector<8x11xf32>
    tpu.vector_store %arg4[%c0_3, %c0_4], %2 {strides = array<i32>} : memref<8x128xf32, #tpu.memory_space<vmem>>, vector<8x11xf32>,
    %c0_5 = arith.constant 0 : index
    %c0_6 = arith.constant 0 : index
    %4 = vector.load %arg1[%c0_5, %c0_6] : memref<384x128xbf16, #tpu.memory_space<vmem>>, vector<128x128xbf16>
    %c128 = arith.constant 128 : index
    %c0_7 = arith.constant 0 : index
    %5 = vector.load %arg1[%c128, %c0_7] : memref<384x128xbf16, #tpu.memory_space<vmem>>, vector<128x128xbf16>
    %c256 = arith.constant 256 : index
    %c0_8 = arith.constant 0 : index
    %6 = vector.load %arg1[%c256, %c0_8] : memref<384x128xbf16, #tpu.memory_space<vmem>>, vector<128x128xbf16>
    %c0_9 = arith.constant 0 : index
    %c0_10 = arith.constant 0 : index
    %7 = vector.load %arg4[%c0_9, %c0_10] : memref<8x128xf32, #tpu.memory_space<vmem>>, vector<8x128xf32>
    %8 = arith.truncf %7 : vector<8x128xf32> to vector<8x128xbf16>
    %cst_11 = arith.constant dense<0.000000e+00> : vector<8x128xf32>
    %9 = tpu.matmul %8, %4, %cst_11 {dimension_numbers = #tpu.dot_dimension_numbers<[1], [0], [0], [1], [0, 0, 1, 1], [], []>} : vector<8x128xbf16>, vector<128x128xbf16>, vector<8x128xf32> -> vector<8x128xf32>
    %c0_12 = arith.constant 0 : index
    %c0_13 = arith.constant 0 : index
    %10 = vector.load %arg2[%c0_12, %c0_13] : memref<24x128xf32, #tpu.memory_space<vmem>>, vector<8x128xf32>
    %11 = arith.addf %9, %10 : vector<8x128xf32>
    %cst_14 = arith.constant 0.000000e+00 : f32
    %12 = vector.broadcast %cst_14 : f32 to vector<8x128xf32>
    %13 = arith.maximumf %11, %12 : vector<8x128xf32>
    %14 = arith.truncf %13 : vector<8x128xf32> to vector<8x128xbf16>
    %cst_15 = arith.constant dense<0.000000e+00> : vector<8x128xf32>
    %15 = tpu.matmul %14, %5, %cst_15 {dimension_numbers = #tpu.dot_dimension_numbers<[1], [0], [0], [1], [0, 0, 1, 1], [], []>} : vector<8x128xbf16>, vector<128x128xbf16>, vector<8x128xf32> -> vector<8x128xf32>
    %c8 = arith.constant 8 : index
    %c0_16 = arith.constant 0 : index
    %16 = vector.load %arg2[%c8, %c0_16] : memref<24x128xf32, #tpu.memory_space<vmem>>, vector<8x128xf32>
    %17 = arith.addf %15, %16 : vector<8x128xf32>
    %cst_17 = arith.constant 0.000000e+00 : f32
    %18 = vector.broadcast %cst_17 : f32 to vector<8x128xf32>
    %19 = arith.maximumf %17, %18 : vector<8x128xf32>
    %20 = arith.truncf %19 : vector<8x128xf32> to vector<8x128xbf16>
    %cst_18 = arith.constant dense<0.000000e+00> : vector<8x128xf32>
    %21 = tpu.matmul %20, %6, %cst_18 {dimension_numbers = #tpu.dot_dimension_numbers<[1], [0], [0], [1], [0, 0, 1, 1], [], []>} : vector<8x128xbf16>, vector<128x128xbf16>, vector<8x128xf32> -> vector<8x128xf32>
    %c16 = arith.constant 16 : index
    %c0_19 = arith.constant 0 : index
    %22 = vector.load %arg2[%c16, %c0_19] : memref<24x128xf32, #tpu.memory_space<vmem>>, vector<8x128xf32>
    %23 = arith.addf %21, %22 : vector<8x128xf32>
    %24 = vector.extract_strided_slice %23 {offsets = [0, 0], sizes = [8, 3], strides = [1, 1]} : vector<8x128xf32> to vector<8x3xf32>
    %c0_20 = arith.constant 0 : index
    %c0_21 = arith.constant 0 : index
    %25 = vector.load %arg3[%c0_20, %c0_21] : memref<8x3xf32, #tpu.memory_space<vmem>>, vector<8x3xf32>
    tpu.vector_store %arg3[%c0_20, %c0_21], %24 {strides = array<i32>} : memref<8x3xf32, #tpu.memory_space<vmem>>, vector<8x3xf32>,
    return
  }
}

</mosaic_0001>

<llo_original>
// kernel: linear_q_model_forward.1
$region0: #{linear_q_model_forward.1}
  #allocation0 [shape = 'u32[]', space=smem, size = 0x4, offset = 0x4, fixed_abs, tag = 'smem constant byte address 0x4 - core index']
  #allocation1 [shape = 'u32[72,128]{1,0:T(1,128)}', space=vmem, size = 0x9000, scoped, tag = 'internal scratch']
  #allocation2 [shape = 'f32[8,128]{1,0:T(8,128)}', space=vmem, size = 0x1000, scoped, tag = 'scratch operand']
  %s0 = inlined_call_operand.hbm [shape: f32[8,11], index: 0, kind: input, shape index: {}]
  %s1 = inlined_call_operand.hbm [shape: bf16[384,128], index: 1, kind: input, shape index: {}]
  %s2 = inlined_call_operand.hbm [shape: f32[24,128], index: 2, kind: input, shape index: {}]
  %s3 = inlined_call_operand.vmem [shape: f32[8,3], index: 3, kind: output, shape index: {}]
  %s4 = sld [smem:[#allocation0]]
  $region34: #{linear_q_model_forward.1} parent=0
    _
  %s6 = ssub.s32 1, %s4
  %s7 = scalar_select 0, %s6, %s4
  $region1: #{linear_q_model_forward.1} parent=0
    #allocation3 [shape = 'u8[4096]{0}', space=vmem, size = 0x1000, scoped, tag = 'input window, operand 0, single buffered']
    #allocation4 [shape = 's32[1]{0}', space=sflag, size = 0x4, scoped, tag = 'scoped memory for linear_q_model_forward.1']
    #allocation5 [shape = 'u8[98304]{0}', space=vmem, size = 0x18000, scoped, tag = 'input window, operand 1, single buffered']
    #allocation6 [shape = 's32[1]{0}', space=sflag, size = 0x4, scoped, tag = 'scoped memory for linear_q_model_forward.1']
    #allocation7 [shape = 'u8[12288]{0}', space=vmem, size = 0x3000, scoped, tag = 'input window, operand 2, single buffered']
    %8 = vsyncpa [#allocation4], 0
    %9 = vsyncpa [#allocation6], 0
    // Predicated region
    $region2: #{linear_q_model_forward.1} parent=1 // pred_check
      _
    $region3: #{linear_q_model_forward.1} parent=1 // pred_check_branch
      %11 = sbr.rel (0) target = $region5
    $region4: #{linear_q_model_forward.1} parent=1 // pred_region
      %13 = vsyncadd [#allocation4], 0
      %s15 = sshll.u32 %s0, 4
      %s16 = int_to_ptr.hbm [resolvable:$true] %s15
      %s17 = sshll.u32 [#allocation3], 4
      %s18 = int_to_ptr.vmem [resolvable:$true] %s17
      %20 = dma.hbm_to_vmem [thread:$0]  %s16, 128, %s18, [#allocation4]
    $region5: #{linear_q_model_forward.1} parent=1 // pred_fallthru
      _
    // Predicated region
    $region6: #{linear_q_model_forward.1} parent=1 // pred_check
      _
    $region7: #{linear_q_model_forward.1} parent=1 // pred_check_branch
      %22 = sbr.rel (0) target = $region9
    $region8: #{linear_q_model_forward.1} parent=1 // pred_region
      %24 = vsyncadd [#allocation6], 0
      %s25 = sshll.u32 %s1, 4
      %s26 = int_to_ptr.hbm [resolvable:$true] %s25
      %s27 = sshll.u32 [#allocation5], 4
      %s28 = int_to_ptr.vmem [resolvable:$true] %s27
      %33 = dma.hbm_to_vmem [thread:$0]  %s26, 3072, %s28, [#allocation6], 64, 64, 4
    $region9: #{linear_q_model_forward.1} parent=1 // pred_fallthru
      _
    // Predicated region
    $region10: #{linear_q_model_forward.1} parent=1 // pred_check
      _
    $region11: #{linear_q_model_forward.1} parent=1 // pred_check_branch
      %35 = sbr.rel (0) target = $region13
    $region12: #{linear_q_model_forward.1} parent=1 // pred_region
      %37 = vsyncadd [#allocation6], 0
      %s38 = sshll.u32 %s2, 4
      %s39 = int_to_ptr.hbm [resolvable:$true] %s38
      %s40 = sshll.u32 [#allocation7], 4
      %s41 = int_to_ptr.vmem [resolvable:$true] %s40
      %46 = dma.hbm_to_vmem [thread:$0]  %s39, 384, %s41, [#allocation6], 128, 128, 8
    $region13: #{linear_q_model_forward.1} parent=1 // pred_fallthru
      _
    // Predicated region
    $region14: #{linear_q_model_forward.1} parent=1 // pred_check
      _
    $region15: #{linear_q_model_forward.1} parent=1 // pred_check_branch
      %48 = sbr.rel (0) target = $region17
    $region16: #{linear_q_model_forward.1} parent=1 // pred_region
      %50 = dma.done [#allocation4], 128
    $region17: #{linear_q_model_forward.1} parent=1 // pred_fallthru
      _
    // Predicated region
    $region18: #{linear_q_model_forward.1} parent=1 // pred_check
      _
    $region19: #{linear_q_model_forward.1} parent=1 // pred_check_branch
      %52 = sbr.rel (0) target = $region21
    $region20: #{linear_q_model_forward.1} parent=1 // pred_region
      %54 = dma.done [#allocation6], 3072
    $region21: #{linear_q_model_forward.1} parent=1 // pred_fallthru
      _
    // Predicated region
    $region22: #{linear_q_model_forward.1} parent=1 // pred_check
      _
    $region23: #{linear_q_model_forward.1} parent=1 // pred_check_branch
      %56 = sbr.rel (0) target = $region25
    $region24: #{linear_q_model_forward.1} parent=1 // pred_region
      %58 = dma.done [#allocation6], 384
    $region25: #{linear_q_model_forward.1} parent=1 // pred_fallthru
      _
    %59 = vst [vmem:[#allocation2] sm:$0xff] 0.0
    %v60 = vld [vmem:[#allocation3] sm:$0xff]
    %vm61 = vcmask 89088
    %62 = vst.msk [vmem:[#allocation2] sm:$0xff] %vm61, %v60
    %v63 = vld [vmem:[#allocation5] sm:$0xf]
    %v64 = vld [vmem:[#allocation5 + $0x4] sm:$0xf]
    %v65 = vld [vmem:[#allocation5 + $0x8] sm:$0xf]
    %v66 = vld [vmem:[#allocation5 + $0xc] sm:$0xf]
    %v67 = vld [vmem:[#allocation5 + $0x10] sm:$0xf]
    %v68 = vld [vmem:[#allocation5 + $0x14] sm:$0xf]
    %v69 = vld [vmem:[#allocation5 + $0x18] sm:$0xf]
    %v70 = vld [vmem:[#allocation5 + $0x1c] sm:$0xf]
    %v71 = vld [vmem:[#allocation5 + $0x20] sm:$0xf]
    %v72 = vld [vmem:[#allocation5 + $0x24] sm:$0xf]
    %v73 = vld [vmem:[#allocation5 + $0x28] sm:$0xf]
    %v74 = vld [vmem:[#allocation5 + $0x2c] sm:$0xf]
    %v75 = vld [vmem:[#allocation5 + $0x30] sm:$0xf]
    %v76 = vld [vmem:[#allocation5 + $0x34] sm:$0xf]
    %v77 = vld [vmem:[#allocation5 + $0x38] sm:$0xf]
    %v78 = vld [vmem:[#allocation5 + $0x3c] sm:$0xf]
    %v79 = vld [vmem:[#allocation5 + $0x40] sm:$0xf]
    %v80 = vld [vmem:[#allocation5 + $0x44] sm:$0xf]
    %v81 = vld [vmem:[#allocation5 + $0x48] sm:$0xf]
    %v82 = vld [vmem:[#allocation5 + $0x4c] sm:$0xf]
    %v83 = vld [vmem:[#allocation5 + $0x50] sm:$0xf]
    %v84 = vld [vmem:[#allocation5 + $0x54] sm:$0xf]
    %v85 = vld [vmem:[#allocation5 + $0x58] sm:$0xf]
    %v86 = vld [vmem:[#allocation5 + $0x5c] sm:$0xf]
    %v87 = vld [vmem:[#allocation5 + $0x60] sm:$0xf]
    %v88 = vld [vmem:[#allocation5 + $0x64] sm:$0xf]
    %v89 = vld [vmem:[#allocation5 + $0x68] sm:$0xf]
    %v90 = vld [vmem:[#allocation5 + $0x6c] sm:$0xf]
    %v91 = vld [vmem:[#allocation5 + $0x70] sm:$0xf]
    %v92 = vld [vmem:[#allocation5 + $0x74] sm:$0xf]
    %v93 = vld [vmem:[#allocation5 + $0x78] sm:$0xf]
    %v94 = vld [vmem:[#allocation5 + $0x7c] sm:$0xf]
    %v95 = vld [vmem:[#allocation5 + $0x80] sm:$0xf]
    %v96 = vld [vmem:[#allocation5 + $0x84] sm:$0xf]
    %v97 = vld [vmem:[#allocation5 + $0x88] sm:$0xf]
    %v98 = vld [vmem:[#allocation5 + $0x8c] sm:$0xf]
    %v99 = vld [vmem:[#allocation5 + $0x90] sm:$0xf]
    %v100 = vld [vmem:[#allocation5 + $0x94] sm:$0xf]
    %v101 = vld [vmem:[#allocation5 + $0x98] sm:$0xf]
    %v102 = vld [vmem:[#allocation5 + $0x9c] sm:$0xf]
    %v103 = vld [vmem:[#allocation5 + $0xa0] sm:$0xf]
    %v104 = vld [vmem:[#allocation5 + $0xa4] sm:$0xf]
    %v105 = vld [vmem:[#allocation5 + $0xa8] sm:$0xf]
    %v106 = vld [vmem:[#allocation5 + $0xac] sm:$0xf]
    %v107 = vld [vmem:[#allocation5 + $0xb0] sm:$0xf]
    %v108 = vld [vmem:[#allocation5 + $0xb4] sm:$0xf]
    %v109 = vld [vmem:[#allocation5 + $0xb8] sm:$0xf]
    %v110 = vld [vmem:[#allocation5 + $0xbc] sm:$0xf]
    %v111 = vld [vmem:[#allocation2] sm:$0xff]
    %v112 = vpack.c.bf16 %v111, %v111
    %v113 = vld [vmem:[#allocation7] sm:$0xff]
    %v130 = vunpack.c.l.b16 %v63
    %v131 = vunpack.c.l.b16 %v64
    %v132 = vunpack.c.l.b16 %v65
    %v133 = vunpack.c.l.b16 %v66
    %v134 = vunpack.c.l.b16 %v67
    %v135 = vunpack.c.l.b16 %v68
    %v136 = vunpack.c.l.b16 %v69
    %v137 = vunpack.c.l.b16 %v70
    %v138 = vunpack.c.l.b16 %v71
    %v139 = vunpack.c.l.b16 %v72
    %v140 = vunpack.c.l.b16 %v73
    %v141 = vunpack.c.l.b16 %v74
    %v142 = vunpack.c.l.b16 %v75
    %v143 = vunpack.c.l.b16 %v76
    %v144 = vunpack.c.l.b16 %v77
    %v145 = vunpack.c.l.b16 %v78
    %v146 = vpack.c.b16 %v131, %v130
    %v147 = vpack.c.b16 %v133, %v132
    %v148 = vpack.c.b16 %v135, %v134
    %v149 = vpack.c.b16 %v137, %v136
    %v150 = vpack.c.b16 %v139, %v138
    %v151 = vpack.c.b16 %v141, %v140
    %v152 = vpack.c.b16 %v143, %v142
    %v153 = vpack.c.b16 %v145, %v144
    %162 = vmatpush.bf16.msra.mxu0 %v153
    %163 = vmatpush.bf16.msra.mxu0 %v152
    %164 = vmatpush.bf16.msra.mxu0 %v151
    %165 = vmatpush.bf16.msra.mxu0 %v150
    %166 = vmatpush.bf16.msra.mxu0 %v149
    %167 = vmatpush.bf16.msra.mxu0 %v148
    %168 = vmatpush.bf16.msra.mxu0 %v147
    %169 = vmatpush.bf16.msra.mxu0 %v146
    %170 = vmatmul.bf16.gmra.mxu0 %v112
    %v171 = vpop.f32.mrf.mxu0
    %v172 = vadd.f32 %v113, %v171
    %v173 = vpop.f32.mrf.mxu0
    %174 = vdwg.mxu0
    %v175 = vmax.f32 %v172, 0.0
    %v176 = vpack.c.bf16 %v175, %v175
    %v177 = vld [vmem:[#allocation7 + $0x8] sm:$0xff]
    %v194 = vunpack.c.l.b16 %v79
    %v195 = vunpack.c.l.b16 %v80
    %v196 = vunpack.c.l.b16 %v81
    %v197 = vunpack.c.l.b16 %v82
    %v198 = vunpack.c.l.b16 %v83
    %v199 = vunpack.c.l.b16 %v84
    %v200 = vunpack.c.l.b16 %v85
    %v201 = vunpack.c.l.b16 %v86
    %v202 = vunpack.c.l.b16 %v87
    %v203 = vunpack.c.l.b16 %v88
    %v204 = vunpack.c.l.b16 %v89
    %v205 = vunpack.c.l.b16 %v90
    %v206 = vunpack.c.l.b16 %v91
    %v207 = vunpack.c.l.b16 %v92
    %v208 = vunpack.c.l.b16 %v93
    %v209 = vunpack.c.l.b16 %v94
    %v210 = vpack.c.b16 %v195, %v194
    %v211 = vpack.c.b16 %v197, %v196
    %v212 = vpack.c.b16 %v199, %v198
    %v213 = vpack.c.b16 %v201, %v200
    %v214 = vpack.c.b16 %v203, %v202
    %v215 = vpack.c.b16 %v205, %v204
    %v216 = vpack.c.b16 %v207, %v206
    %v217 = vpack.c.b16 %v209, %v208
    %226 = vmatpush.bf16.msra.mxu0 %v217
    %227 = vmatpush.bf16.msra.mxu0 %v216
    %228 = vmatpush.bf16.msra.mxu0 %v215
    %229 = vmatpush.bf16.msra.mxu0 %v214
    %230 = vmatpush.bf16.msra.mxu0 %v213
    %231 = vmatpush.bf16.msra.mxu0 %v212
    %232 = vmatpush.bf16.msra.mxu0 %v211
    %233 = vmatpush.bf16.msra.mxu0 %v210
    %234 = vmatmul.bf16.gmra.mxu0 %v176
    %v235 = vpop.f32.mrf.mxu0
    %v236 = vadd.f32 %v177, %v235
    %v237 = vpop.f32.mrf.mxu0
    %238 = vdwg.mxu0
    %v239 = vmax.f32 %v236, 0.0
    %v240 = vpack.c.bf16 %v239, %v239
    %v241 = vld [vmem:[#allocation7 + $0x10] sm:$0xff]
    %v258 = vunpack.c.l.b16 %v95
    %v259 = vunpack.c.l.b16 %v96
    %v260 = vunpack.c.l.b16 %v97
    %v261 = vunpack.c.l.b16 %v98
    %v262 = vunpack.c.l.b16 %v99
    %v263 = vunpack.c.l.b16 %v100
    %v264 = vunpack.c.l.b16 %v101
    %v265 = vunpack.c.l.b16 %v102
    %v266 = vunpack.c.l.b16 %v103
    %v267 = vunpack.c.l.b16 %v104
    %v268 = vunpack.c.l.b16 %v105
    %v269 = vunpack.c.l.b16 %v106
    %v270 = vunpack.c.l.b16 %v107
    %v271 = vunpack.c.l.b16 %v108
    %v272 = vunpack.c.l.b16 %v109
    %v273 = vunpack.c.l.b16 %v110
    %v274 = vpack.c.b16 %v259, %v258
    %v275 = vpack.c.b16 %v261, %v260
    %v276 = vpack.c.b16 %v263, %v262
    %v277 = vpack.c.b16 %v265, %v264
    %v278 = vpack.c.b16 %v267, %v266
    %v279 = vpack.c.b16 %v269, %v268
    %v280 = vpack.c.b16 %v271, %v270
    %v281 = vpack.c.b16 %v273, %v272
    %290 = vmatpush.bf16.msra.mxu0 %v281
    %291 = vmatpush.bf16.msra.mxu0 %v280
    %292 = vmatpush.bf16.msra.mxu0 %v279
    %293 = vmatpush.bf16.msra.mxu0 %v278
    %294 = vmatpush.bf16.msra.mxu0 %v277
    %295 = vmatpush.bf16.msra.mxu0 %v276
    %296 = vmatpush.bf16.msra.mxu0 %v275
    %297 = vmatpush.bf16.msra.mxu0 %v274
    %298 = vmatmul.bf16.gmra.mxu0 %v240
    %v299 = vpop.f32.mrf.mxu0
    %v300 = vadd.f32 %v241, %v299
    %v301 = vpop.f32.mrf.mxu0
    %302 = vdwg.mxu0
    %vm303 = vcmask 23552
    %304 = vst.msk [vmem:[%s3] sm:$0xff] %vm303, %v300
    // Predicated region
    $region26: #{linear_q_model_forward.1} parent=1 // pred_check
      _
    $region27: #{linear_q_model_forward.1} parent=1 // pred_check_branch
      %306 = sbr.rel (0) target = $region29
    $region28: #{linear_q_model_forward.1} parent=1 // pred_region
      _
    $region29: #{linear_q_model_forward.1} parent=1 // pred_fallthru
      _
    // Predicated region
    $region30: #{linear_q_model_forward.1} parent=1 // pred_check
      _
    $region31: #{linear_q_model_forward.1} parent=1 // pred_check_branch
      %308 = sbr.rel (0) target = $region33
    $region32: #{linear_q_model_forward.1} parent=1 // pred_region
      _
    $region33: #{linear_q_model_forward.1} parent=1 // pred_fallthru
      _
    %309 = vsyncpa [#allocation4], 1
    %310 = vsyncpa [#allocation6], 1

</llo_original>
